<compile_context>
chip_gen: v6e
topology: v6e:2x2x1
jax: 0.10.0
libtpu: 0.0.40
codegen_flags: <defaults>
</compile_context>

<pallas_src>
from functools import partial

import jax
import jax.numpy as jnp
from jax.experimental import pallas as pl
from jax.experimental.pallas import tpu as pltpu

K_OUT = 25          # k (logical output width)
S_IN = 5            # s (logical input features)
HIDDEN = 500        # logical hidden width

S_PAD = 8           # input features padded to a sublane multiple
H_PAD = 512         # hidden padded to a lane multiple (4 * 128)
K_PAD = 128         # MXU output width for layer 3 (sliced to K_OUT on store)


def _round_up(a, b):
    return -(-a // b) * b


def _tpu_config():
    """Generation-dependent knobs (decided in Python, baked in statically)."""
    kind = ""
    try:
        kind = jax.devices()[0].device_kind.lower()
    except Exception:
        pass
    is_v5e = ("v5 lite" in kind) or ("v5e" in kind) or ("v5litepod" in kind)
    is_v7 = "v7" in kind
    return {
        # v5e: MXU is the binding unit -> keep layer 1 on the VPU (free filler).
        "use_mxu_layer1": not is_v5e,
        # v7x has half the VMEM of v5e/v6e.
        "tile_cap": 1024 if is_v7 else 2048,
        # v7x: 2 TensorCores -> always give the grid >= 2 balanced tiles.
        "two_step_grid": is_v7,
    }


# ----------------------------- kernels ------------------------------------


def _mlp_kernel_mxu(x_ref, w1_ref, b1_ref, w2_ref, b2_ref, w3_ref, b3_ref, o_ref):
    # Layer 1 on the MXU: (tile_n, 8) bf16 @ (8, H_PAD) bf16 -> f32 accumulate.
    x = x_ref[...].astype(jnp.bfloat16)
    h1 = jnp.dot(x, w1_ref[...], preferred_element_type=jnp.float32) + b1_ref[...]
    h1 = jnp.maximum(h1, 0.0)                                   # ReLU

    h2 = jnp.dot(h1.astype(jnp.bfloat16), w2_ref[...],
                 preferred_element_type=jnp.float32) + b2_ref[...]
    h2 = jnp.maximum(h2, 0.0)                                   # ReLU

    out = jnp.dot(h2.astype(jnp.bfloat16), w3_ref[...],
                  preferred_element_type=jnp.float32) + b3_ref[...]
    # Store only the 25 logical output columns (lane-sliced masked store);
    # the padded columns 25..127 are never written to HBM.
    o_ref[...] = out[:, :K_OUT].astype(o_ref.dtype)


def _mlp_kernel_vpu(x_ref, w1_ref, b1_ref, w2_ref, b2_ref, w3_ref, b3_ref, o_ref):
    # v5e path: layer-1 contraction dim is only 5 -> unrolled VPU broadcast-FMAs
    # (keeps the already-saturated MXU free for layers 2/3).
    x = x_ref[...]                       # (tile_n, S_PAD) f32, cols 5..7 are zero
    w1 = w1_ref[...]                     # (S_PAD, H_PAD)  f32

    h1 = jnp.broadcast_to(b1_ref[...], (x.shape[0], H_PAD))
    for i in range(S_IN):                # only the 5 real input features
        # TODO(synk): verify on a v5e bundle dump that the (tile_n,1) column
        # broadcast lowers to sublane splats only (no per-row XLU traffic).
        h1 = h1 + x[:, i:i + 1] * w1[i:i + 1, :]
    h1 = jnp.maximum(h1, 0.0)            # ReLU

    h2 = jnp.dot(h1.astype(jnp.bfloat16), w2_ref[...],
                 preferred_element_type=jnp.float32) + b2_ref[...]
    h2 = jnp.maximum(h2, 0.0)            # ReLU

    out = jnp.dot(h2.astype(jnp.bfloat16), w3_ref[...],
                  preferred_element_type=jnp.float32) + b3_ref[...]
    o_ref[...] = out[:, :K_OUT].astype(o_ref.dtype)


# ----------------------------- wrapper -------------------------------------


def prepare_params(w1, b1, w2, b2, w3, b3, use_mxu_layer1=True):
    """Pad / cast weights once at init (zero padding is mathematically inert).

    Weights are (fan_in, fan_out), biases (1, fan_out). w2/w3 become bf16
    (halves the dominant HBM/VMEM traffic); w1 is bf16 only on the MXU path.
    """
    w1_dtype = jnp.bfloat16 if use_mxu_layer1 else jnp.float32
    w1p = jnp.pad(w1, ((0, S_PAD - S_IN), (0, H_PAD - HIDDEN))).astype(w1_dtype)
    b1p = jnp.pad(b1, ((0, 0), (0, H_PAD - HIDDEN))).astype(jnp.float32)
    w2p = jnp.pad(w2, ((0, H_PAD - HIDDEN), (0, H_PAD - HIDDEN))).astype(jnp.bfloat16)
    b2p = jnp.pad(b2, ((0, 0), (0, H_PAD - HIDDEN))).astype(jnp.float32)
    w3p = jnp.pad(w3, ((0, H_PAD - HIDDEN), (0, K_PAD - K_OUT))).astype(jnp.bfloat16)
    b3p = jnp.pad(b3, ((0, 0), (0, K_PAD - K_OUT))).astype(jnp.float32)
    return (w1p, b1p, w2p, b2p, w3p, b3p)


@partial(jax.jit, static_argnames=("use_mxu_layer1", "tile_cap", "two_step_grid"))
def _mlp_forward_impl(x, w1p, b1p, w2p, b2p, w3p, b3p,
                      *, use_mxu_layer1, tile_cap, two_step_grid):
    n = x.shape[0]
    n8 = _round_up(max(n, 1), 8)

    # Batch tile: as big as the cap allows; on v7x force >= 2 balanced tiles so
    # both TensorCores get work (grid axis is "parallel").
    if two_step_grid and n8 > 8:
        tile_n = min(tile_cap, _round_up(_round_up(n8, 2) // 2, 8))
    else:
        tile_n = min(tile_cap, n8)
    n_pad = _round_up(n8, tile_n)

    # Pad batch rows (zeros) and input features 5 -> 8 (zeros; inert).
    xp = jnp.pad(x.astype(jnp.float32),
                 ((0, n_pad - n), (0, S_PAD - x.shape[1])))

    kernel = _mlp_kernel_mxu if use_mxu_layer1 else _mlp_kernel_vpu
    const = lambda shape: pl.BlockSpec(shape, lambda i: (0, 0))

    out = pl.pallas_call(
        kernel,
        out_shape=jax.ShapeDtypeStruct((n_pad, K_OUT), jnp.float32),
        grid=(n_pad // tile_n,),
        in_specs=[
            pl.BlockSpec((tile_n, S_PAD), lambda i: (i, 0)),   # x tile, pipelined
            const((S_PAD, H_PAD)), const((1, H_PAD)),          # w1, b1 (resident)
            const((H_PAD, H_PAD)), const((1, H_PAD)),          # w2, b2 (resident)
            const((H_PAD, K_PAD)), const((1, K_PAD)),          # w3, b3 (resident)
        ],
        # Lane-sliced logical-width output: no padded 128-lane slab in HBM.
        out_specs=pl.BlockSpec((tile_n, K_OUT), lambda i: (i, 0)),
        compiler_params=pltpu.CompilerParams(
            dimension_semantics=("parallel",),
            vmem_limit_bytes=32 * 1024 * 1024,
        ),
    )(xp, w1p, b1p, w2p, b2p, w3p, b3p)

    return out[:n]


def mlp_forward(x, params, config=None):
    """x: (N, 5) f32; params: output of prepare_params. Returns (N, 25) f32."""
    cfg = config if config is not None else _tpu_config()
    return _mlp_forward_impl(
        x, *params,
        use_mxu_layer1=cfg["use_mxu_layer1"],
        tile_cap=cfg["tile_cap"],
        two_step_grid=cfg["two_step_grid"],
    )


# ----------------------------- test harness --------------------------------


def init_linear_params(key, fan_in, fan_out):
    """PyTorch-style nn.Linear init: U(-1/sqrt(fan_in), 1/sqrt(fan_in)).
    Weight returned as (fan_in, fan_out) (transposed vs torch), bias (1, fan_out)."""
    kw, kb = jax.random.split(key)
    bound = 1.0 / jnp.sqrt(jnp.float32(fan_in))
    w = jax.random.uniform(kw, (fan_in, fan_out), jnp.float32, -bound, bound)
    b = jax.random.uniform(kb, (1, fan_out), jnp.float32, -bound, bound)
    return w, b


def _reference(x, w1, b1, w2, b2, w3, b3):
    h1 = jnp.maximum(x @ w1 + b1, 0.0)
    h2 = jnp.maximum(h1 @ w2 + b2, 0.0)
    return h2 @ w3 + b3


if __name__ == "__main__":
    key = jax.random.PRNGKey(0)
    k_x, k_l1, k_l2, k_out = jax.random.split(key, 4)

    w1, b1 = init_linear_params(k_l1, S_IN, HIDDEN)     # layer1
    w2, b2 = init_linear_params(k_l2, HIDDEN, HIDDEN)   # layer2
    w3, b3 = init_linear_params(k_out, HIDDEN, K_OUT)   # output
    # layer3 / dropout / bn are unused in network.forward -> omitted.

    cfg = _tpu_config()
    params = prepare_params(w1, b1, w2, b2, w3, b3,
                            use_mxu_layer1=cfg["use_mxu_layer1"])
    params = jax.block_until_ready(params)

    ok = True
    for batch in (2, 8, 600):   # tiny, single-tile and multi-tile/non-multiple cases
        x = jax.random.normal(jax.random.fold_in(k_x, batch), (batch, S_IN),
                              jnp.float32)
        out = mlp_forward(x, params, cfg)
        out = jax.block_until_ready(out)
        ref = _reference(x, w1, b1, w2, b2, w3, b3)
        ok &= out.shape == (batch, K_OUT)
        # bf16 weights / bf16-cast activations on the MXU -> relaxed tolerance.
        ok &= bool(jnp.allclose(out, ref, atol=3e-2, rtol=3e-2))

    assert ok, "mismatch vs reference"
    print("KERNEL_OK")
</pallas_src>

<mosaic_0001>
module attributes {stable_mosaic.version = 11 : i64} {
  func.func @_mlp_kernel_mxu(%arg0: i32, %arg1: memref<8x8xf32, #tpu.memory_space<vmem>>, %arg2: memref<8x512xbf16, #tpu.memory_space<vmem>>, %arg3: memref<1x512xf32, #tpu.memory_space<vmem>>, %arg4: memref<512x512xbf16, #tpu.memory_space<vmem>>, %arg5: memref<1x512xf32, #tpu.memory_space<vmem>>, %arg6: memref<512x128xbf16, #tpu.memory_space<vmem>>, %arg7: memref<1x128xf32, #tpu.memory_space<vmem>>, %arg8: memref<8x25xf32, #tpu.memory_space<vmem>>) attributes {dimension_semantics = [#tpu.dimension_semantics<parallel>], iteration_bounds = array<i64: 1>, scalar_prefetch = 0 : i64, scratch_operands = 0 : i64, tpu.core_type = #tpu.core_type<tc>, window_params = [{transform_indices = @transform_0, window_bounds = array<i64: 8, 8>}, {pipeline_mode = #tpu.pipeline_mode<synchronous>, transform_indices = @transform_1, window_bounds = array<i64: 8, 512>}, {pipeline_mode = #tpu.pipeline_mode<synchronous>, transform_indices = @transform_2, window_bounds = array<i64: 1, 512>}, {pipeline_mode = #tpu.pipeline_mode<synchronous>, transform_indices = @transform_3, window_bounds = array<i64: 512, 512>}, {pipeline_mode = #tpu.pipeline_mode<synchronous>, transform_indices = @transform_4, window_bounds = array<i64: 1, 512>}, {pipeline_mode = #tpu.pipeline_mode<synchronous>, transform_indices = @transform_5, window_bounds = array<i64: 512, 128>}, {pipeline_mode = #tpu.pipeline_mode<synchronous>, transform_indices = @transform_6, window_bounds = array<i64: 1, 128>}, {transform_indices = @transform_7, window_bounds = array<i64: 8, 25>}]} {
    %c0 = arith.constant 0 : index
    %c0_0 = arith.constant 0 : index
    %0 = vector.load %arg1[%c0, %c0_0] : memref<8x8xf32, #tpu.memory_space<vmem>>, vector<8x8xf32>
    %1 = arith.truncf %0 : vector<8x8xf32> to vector<8x8xbf16>
    %c0_1 = arith.constant 0 : index
    %c0_2 = arith.constant 0 : index
    %2 = vector.load %arg2[%c0_1, %c0_2] : memref<8x512xbf16, #tpu.memory_space<vmem>>, vector<8x512xbf16>
    %cst = arith.constant dense<0.000000e+00> : vector<8x512xf32>
    %3 = tpu.matmul %1, %2, %cst {dimension_numbers = #tpu.dot_dimension_numbers<[1], [0], [0], [1], [0, 0, 1, 1], [], []>} : vector<8x8xbf16>, vector<8x512xbf16>, vector<8x512xf32> -> vector<8x512xf32>
    %c0_3 = arith.constant 0 : index
    %c0_4 = arith.constant 0 : index
    %4 = vector.load %arg3[%c0_3, %c0_4] : memref<1x512xf32, #tpu.memory_space<vmem>>, vector<1x512xf32>
    %5 = vector.broadcast %4 : vector<1x512xf32> to vector<8x512xf32>
    %6 = arith.addf %3, %5 : vector<8x512xf32>
    %cst_5 = arith.constant 0.000000e+00 : f32
    %7 = vector.broadcast %cst_5 : f32 to vector<8x512xf32>
    %8 = arith.maximumf %6, %7 : vector<8x512xf32>
    %9 = arith.truncf %8 : vector<8x512xf32> to vector<8x512xbf16>
    %c0_6 = arith.constant 0 : index
    %c0_7 = arith.constant 0 : index
    %10 = vector.load %arg4[%c0_6, %c0_7] : memref<512x512xbf16, #tpu.memory_space<vmem>>, vector<512x512xbf16>
    %cst_8 = arith.constant dense<0.000000e+00> : vector<8x512xf32>
    %11 = tpu.matmul %9, %10, %cst_8 {dimension_numbers = #tpu.dot_dimension_numbers<[1], [0], [0], [1], [0, 0, 1, 1], [], []>} : vector<8x512xbf16>, vector<512x512xbf16>, vector<8x512xf32> -> vector<8x512xf32>
    %c0_9 = arith.constant 0 : index
    %c0_10 = arith.constant 0 : index
    %12 = vector.load %arg5[%c0_9, %c0_10] : memref<1x512xf32, #tpu.memory_space<vmem>>, vector<1x512xf32>
    %13 = vector.broadcast %12 : vector<1x512xf32> to vector<8x512xf32>
    %14 = arith.addf %11, %13 : vector<8x512xf32>
    %cst_11 = arith.constant 0.000000e+00 : f32
    %15 = vector.broadcast %cst_11 : f32 to vector<8x512xf32>
    %16 = arith.maximumf %14, %15 : vector<8x512xf32>
    %17 = arith.truncf %16 : vector<8x512xf32> to vector<8x512xbf16>
    %c0_12 = arith.constant 0 : index
    %c0_13 = arith.constant 0 : index
    %18 = vector.load %arg6[%c0_12, %c0_13] : memref<512x128xbf16, #tpu.memory_space<vmem>>, vector<512x128xbf16>
    %cst_14 = arith.constant dense<0.000000e+00> : vector<8x128xf32>
    %19 = tpu.matmul %17, %18, %cst_14 {dimension_numbers = #tpu.dot_dimension_numbers<[1], [0], [0], [1], [0, 0, 1, 1], [], []>} : vector<8x512xbf16>, vector<512x128xbf16>, vector<8x128xf32> -> vector<8x128xf32>
    %c0_15 = arith.constant 0 : index
    %c0_16 = arith.constant 0 : index
    %20 = vector.load %arg7[%c0_15, %c0_16] : memref<1x128xf32, #tpu.memory_space<vmem>>, vector<1x128xf32>
    %21 = vector.broadcast %20 : vector<1x128xf32> to vector<8x128xf32>
    %22 = arith.addf %19, %21 : vector<8x128xf32>
    %23 = vector.extract_strided_slice %22 {offsets = [0, 0], sizes = [8, 25], strides = [1, 1]} : vector<8x128xf32> to vector<8x25xf32>
    %c0_17 = arith.constant 0 : index
    %c0_18 = arith.constant 0 : index
    %24 = vector.load %arg8[%c0_17, %c0_18] : memref<8x25xf32, #tpu.memory_space<vmem>>, vector<8x25xf32>
    tpu.vector_store %arg8[%c0_17, %c0_18], %23 {strides = array<i32>} : memref<8x25xf32, #tpu.memory_space<vmem>>, vector<8x25xf32>,
    return
  }
  func.func @transform_0(%arg0: i32) -> (i32, i32) {
    %c0_i32 = arith.constant 0 : i32
    %c0_i32_0 = arith.constant 0 : i32
    return %arg0, %c0_i32 : i32, i32
  }
  func.func @transform_1(%arg0: i32) -> (i32, i32) {
    %c0_i32 = arith.constant 0 : i32
    %c0_i32_0 = arith.constant 0 : i32
    %c0_i32_1 = arith.constant 0 : i32
    return %c0_i32, %c0_i32_0 : i32, i32
  }
  func.func @transform_2(%arg0: i32) -> (i32, i32) {
    %c0_i32 = arith.constant 0 : i32
    %c0_i32_0 = arith.constant 0 : i32
    %c0_i32_1 = arith.constant 0 : i32
    return %c0_i32, %c0_i32_0 : i32, i32
  }
  func.func @transform_3(%arg0: i32) -> (i32, i32) {
    %c0_i32 = arith.constant 0 : i32
    %c0_i32_0 = arith.constant 0 : i32
    %c0_i32_1 = arith.constant 0 : i32
    return %c0_i32, %c0_i32_0 : i32, i32
  }
  func.func @transform_4(%arg0: i32) -> (i32, i32) {
    %c0_i32 = arith.constant 0 : i32
    %c0_i32_0 = arith.constant 0 : i32
    %c0_i32_1 = arith.constant 0 : i32
    return %c0_i32, %c0_i32_0 : i32, i32
  }
  func.func @transform_5(%arg0: i32) -> (i32, i32) {
    %c0_i32 = arith.constant 0 : i32
    %c0_i32_0 = arith.constant 0 : i32
    %c0_i32_1 = arith.constant 0 : i32
    return %c0_i32, %c0_i32_0 : i32, i32
  }
  func.func @transform_6(%arg0: i32) -> (i32, i32) {
    %c0_i32 = arith.constant 0 : i32
    %c0_i32_0 = arith.constant 0 : i32
    %c0_i32_1 = arith.constant 0 : i32
    return %c0_i32, %c0_i32_0 : i32, i32
  }
  func.func @transform_7(%arg0: i32) -> (i32, i32) {
    %c0_i32 = arith.constant 0 : i32
    %c0_i32_0 = arith.constant 0 : i32
    return %arg0, %c0_i32 : i32, i32
  }
}

</mosaic_0001>

<llo_original>
// kernel: _mlp_forward_impl.1
$region0: #{_mlp_forward_impl.1}
  #allocation0 [shape = 'u32[]', space=smem, size = 0x4, offset = 0x4, fixed_abs, tag = 'smem constant byte address 0x4 - core index']
  #allocation1 [shape = 'u32[144,128]{1,0:T(1,128)}', space=vmem, size = 0x12000, scoped, tag = 'internal scratch']
  %s0 = inlined_call_operand.vmem [shape: f32[8,8], index: 0, kind: input, shape index: {}]
  %s1 = inlined_call_operand.hbm [shape: bf16[8,512], index: 1, kind: input, shape index: {}]
  %s2 = inlined_call_operand.vmem [shape: f32[1,512], index: 2, kind: input, shape index: {}]
  %s3 = inlined_call_operand.hbm [shape: bf16[512,512], index: 3, kind: input, shape index: {}]
  %s4 = inlined_call_operand.vmem [shape: f32[1,512], index: 4, kind: input, shape index: {}]
  %s5 = inlined_call_operand.hbm [shape: bf16[512,128], index: 5, kind: input, shape index: {}]
  %s6 = inlined_call_operand.vmem [shape: f32[1,128], index: 6, kind: input, shape index: {}]
  %s7 = inlined_call_operand.vmem [shape: f32[8,25], index: 7, kind: output, shape index: {}]
  %s8 = sld [smem:[#allocation0]]
  $region50: #{_mlp_forward_impl.1} parent=0
    _
  %s10 = ssub.s32 1, %s8
  %s11 = scalar_select 0, %s10, %s8
  $region1: #{_mlp_forward_impl.1} parent=0
    #allocation2 [shape = 'u8[8192]{0}', space=vmem, size = 0x2000, scoped, tag = 'input window, operand 1, single buffered']
    #allocation3 [shape = 's32[1]{0}', space=sflag, size = 0x4, scoped, tag = 'scoped memory for _mlp_forward_impl.1']
    #allocation4 [shape = 'u8[524288]{0}', space=vmem, size = 0x80000, scoped, tag = 'input window, operand 3, single buffered']
    #allocation5 [shape = 's32[1]{0}', space=sflag, size = 0x4, scoped, tag = 'scoped memory for _mlp_forward_impl.1']
    #allocation6 [shape = 'u8[131072]{0}', space=vmem, size = 0x20000, scoped, tag = 'input window, operand 5, single buffered']
    %12 = vsyncpa [#allocation3], 0
    %13 = vsyncpa [#allocation5], 0
    // Predicated region
    $region2: #{_mlp_forward_impl.1} parent=1 // pred_check
      _
    $region3: #{_mlp_forward_impl.1} parent=1 // pred_check_branch
      %15 = sbr.rel (0) target = $region5
    $region4: #{_mlp_forward_impl.1} parent=1 // pred_region
      _
    $region5: #{_mlp_forward_impl.1} parent=1 // pred_fallthru
      _
    // Predicated region
    $region6: #{_mlp_forward_impl.1} parent=1 // pred_check
      _
    $region7: #{_mlp_forward_impl.1} parent=1 // pred_check_branch
      %17 = sbr.rel (0) target = $region9
    $region8: #{_mlp_forward_impl.1} parent=1 // pred_region
      %s19 = ssub.s32 256, 256
      %20 = vsyncadd [#allocation3], %s19
      %s22 = sshll.u32 [#allocation2], 4
      %s23 = int_to_ptr.vmem [resolvable:$true] %s22
      %25 = dma.hbm_to_vmem [thread:$0]  %s1, 256, %s23, [#allocation3]
    $region9: #{_mlp_forward_impl.1} parent=1 // pred_fallthru
      _
    // Predicated region
    $region10: #{_mlp_forward_impl.1} parent=1 // pred_check
      _
    $region11: #{_mlp_forward_impl.1} parent=1 // pred_check_branch
      %27 = sbr.rel (0) target = $region13
    $region12: #{_mlp_forward_impl.1} parent=1 // pred_region
      _
    $region13: #{_mlp_forward_impl.1} parent=1 // pred_fallthru
      _
    // Predicated region
    $region14: #{_mlp_forward_impl.1} parent=1 // pred_check
      _
    $region15: #{_mlp_forward_impl.1} parent=1 // pred_check_branch
      %29 = sbr.rel (0) target = $region17
    $region16: #{_mlp_forward_impl.1} parent=1 // pred_region
      %s31 = ssub.s32 16384, 16384
      %32 = vsyncadd [#allocation5], %s31
      %s33 = sshll.u32 [#allocation4], 4
      %s34 = int_to_ptr.vmem [resolvable:$true] %s33
      %39 = dma.hbm_to_vmem [thread:$0]  %s3, 16384, %s34, [#allocation5], 256, 256, 16
    $region17: #{_mlp_forward_impl.1} parent=1 // pred_fallthru
      _
    // Predicated region
    $region18: #{_mlp_forward_impl.1} parent=1 // pred_check
      _
    $region19: #{_mlp_forward_impl.1} parent=1 // pred_check_branch
      %41 = sbr.rel (0) target = $region21
    $region20: #{_mlp_forward_impl.1} parent=1 // pred_region
      _
    $region21: #{_mlp_forward_impl.1} parent=1 // pred_fallthru
      _
    // Predicated region
    $region22: #{_mlp_forward_impl.1} parent=1 // pred_check
      _
    $region23: #{_mlp_forward_impl.1} parent=1 // pred_check_branch
      %43 = sbr.rel (0) target = $region25
    $region24: #{_mlp_forward_impl.1} parent=1 // pred_region
      %s45 = ssub.s32 4096, 4096
      %46 = vsyncadd [#allocation5], %s45
      %s47 = sshll.u32 [#allocation6], 4
      %s48 = int_to_ptr.vmem [resolvable:$true] %s47
      %53 = dma.hbm_to_vmem [thread:$0]  %s5, 4096, %s48, [#allocation5], 64, 64, 4
    $region25: #{_mlp_forward_impl.1} parent=1 // pred_fallthru
      _
    // Predicated region
    $region26: #{_mlp_forward_impl.1} parent=1 // pred_check
      _
    $region27: #{_mlp_forward_impl.1} parent=1 // pred_check_branch
      %55 = sbr.rel (0) target = $region29
    $region28: #{_mlp_forward_impl.1} parent=1 // pred_region
      _
    $region29: #{_mlp_forward_impl.1} parent=1 // pred_fallthru
      _
    // Predicated region
    $region30: #{_mlp_forward_impl.1} parent=1 // pred_check
      _
    $region31: #{_mlp_forward_impl.1} parent=1 // pred_check_branch
      %57 = sbr.rel (0) target = $region33
    $region32: #{_mlp_forward_impl.1} parent=1 // pred_region
      %58 = dma.done [#allocation3], 256
    $region33: #{_mlp_forward_impl.1} parent=1 // pred_fallthru
      _
    // Predicated region
    $region34: #{_mlp_forward_impl.1} parent=1 // pred_check
      _
    $region35: #{_mlp_forward_impl.1} parent=1 // pred_check_branch
      %60 = sbr.rel (0) target = $region37
    $region36: #{_mlp_forward_impl.1} parent=1 // pred_region
      %61 = dma.done [#allocation5], 16384
    $region37: #{_mlp_forward_impl.1} parent=1 // pred_fallthru
      _
    // Predicated region
    $region38: #{_mlp_forward_impl.1} parent=1 // pred_check
      _
    $region39: #{_mlp_forward_impl.1} parent=1 // pred_check_branch
      %63 = sbr.rel (0) target = $region41
    $region40: #{_mlp_forward_impl.1} parent=1 // pred_region
      %64 = dma.done [#allocation5], 4096
    $region41: #{_mlp_forward_impl.1} parent=1 // pred_fallthru
      _
    %v66 = vld [vmem:[%s0] sm:$0xff]
    %v67 = vpack.c.bf16 %v66, %v66
    %v68 = vld [vmem:[#allocation2] sm:$0xff]
    %v69 = vld [vmem:[#allocation2 + $0x8] sm:$0xff]
    %v70 = vld [vmem:[%s2] sm:$0xf]
    %v72 = vlaneseq
    %v73 = vshrl.u32 %v72, 7
    %v74 = vsub.s32 0, %v73
    %v75 = vrot.slane %v70, %v74
    %v76 = vlaneseq
    %v77 = vshrl.u32 %v76, 7
    %v78 = vsub.s32 1, %v77
    %v79 = vrot.slane %v70, %v78
    %v80 = vlaneseq
    %v81 = vshrl.u32 %v80, 7
    %v82 = vsub.s32 2, %v81
    %v83 = vrot.slane %v70, %v82
    %v84 = vlaneseq
    %v85 = vshrl.u32 %v84, 7
    %v86 = vsub.s32 3, %v85
    %v87 = vrot.slane %v70, %v86
    %v94 = vunpack.c.l.b16 %v68
    %v95 = vunpack.c.h.b16 %v68
    %v96 = vunpack.c.l.b16 %v69
    %v97 = vunpack.c.h.b16 %v69
    %v98 = vpack.c.b16 %v94, %v94
    %v99 = vpack.c.b16 %v95, %v95
    %v100 = vpack.c.b16 %v96, %v96
    %v101 = vpack.c.b16 %v97, %v97
    %vm102 = vcmask 64512
    %v104 = vsel %vm102, %v67, 0
    %vm106 = vcmask 1043456
    %v108 = vsel %vm106, %v98, 0
    %v111 = vsel %vm106, %v99, 0
    %v114 = vsel %vm106, %v100, 0
    %v117 = vsel %vm106, %v101, 0
    %119 = vmatprep.subr.bf16.mxu0 0
    %120 = vmatpush1.bf16.msra.mxu0 0
    %121 = vmatprep.subr.bf16.mxu0 0
    %122 = vmatpush1.bf16.msra.mxu0 0
    %123 = vmatprep.subr.bf16.mxu0 0
    %124 = vmatpush1.bf16.msra.mxu0 0
    %125 = vmatprep.subr.bf16.mxu0 0
    %126 = vmatpush1.bf16.msra.mxu0 0
    %127 = vmatprep.subr.bf16.mxu0 0
    %128 = vmatpush1.bf16.msra.mxu0 0
    %129 = vmatprep.subr.bf16.mxu0 0
    %130 = vmatpush1.bf16.msra.mxu0 0
    %131 = vmatprep.subr.bf16.mxu0 0
    %132 = vmatpush1.bf16.msra.mxu0 0
    %133 = vmatprep.subr.bf16.mxu0 %v111
    %134 = vmatpush1.bf16.msra.mxu0 %v108
    %135 = vmatprep.subr.bf16.mxu0 0
    %136 = vmatpush2.bf16.msra.mxu0 0
    %137 = vmatprep.subr.bf16.mxu0 0
    %138 = vmatpush2.bf16.msra.mxu0 0
    %139 = vmatprep.subr.bf16.mxu0 0
    %140 = vmatpush2.bf16.msra.mxu0 0
    %141 = vmatprep.subr.bf16.mxu0 0
    %142 = vmatpush2.bf16.msra.mxu0 0
    %143 = vmatprep.subr.bf16.mxu0 0
    %144 = vmatpush2.bf16.msra.mxu0 0
    %145 = vmatprep.subr.bf16.mxu0 0
    %146 = vmatpush2.bf16.msra.mxu0 0
    %147 = vmatprep.subr.bf16.mxu0 0
    %148 = vmatpush2.bf16.msra.mxu0 0
    %149 = vmatprep.subr.bf16.mxu0 0
    %150 = vmatpush2.bf16.msra.mxu0 0
    %151 = vmatprep.mubr.bf16.mxu0 0
    %152 = vmatmul.mubr.bf16.gmra.mxu0 %v104
    %v153 = vpop.f32.mrf.mxu0
    %v154 = vadd.f32 %v75, %v153
    %v155 = vpop.f32.mrf.mxu0
    %v156 = vadd.f32 %v79, %v155
    %v157 = vpop.f32.mrf.mxu0
    %v158 = vpop.f32.mrf.mxu0
    %159 = vdwg.mxu0
    %160 = vmatprep.subr.bf16.mxu0 0
    %161 = vmatpush1.bf16.msra.mxu0 0
    %162 = vmatprep.subr.bf16.mxu0 0
    %163 = vmatpush1.bf16.msra.mxu0 0
    %164 = vmatprep.subr.bf16.mxu0 0
    %165 = vmatpush1.bf16.msra.mxu0 0
    %166 = vmatprep.subr.bf16.mxu0 0
    %167 = vmatpush1.bf16.msra.mxu0 0
    %168 = vmatprep.subr.bf16.mxu0 0
    %169 = vmatpush1.bf16.msra.mxu0 0
    %170 = vmatprep.subr.bf16.mxu0 0
    %171 = vmatpush1.bf16.msra.mxu0 0
    %172 = vmatprep.subr.bf16.mxu0 0
    %173 = vmatpush1.bf16.msra.mxu0 0
    %174 = vmatprep.subr.bf16.mxu0 %v117
    %175 = vmatpush1.bf16.msra.mxu0 %v114
    %176 = vmatprep.subr.bf16.mxu0 0
    %177 = vmatpush2.bf16.msra.mxu0 0
    %178 = vmatprep.subr.bf16.mxu0 0
    %179 = vmatpush2.bf16.msra.mxu0 0
    %180 = vmatprep.subr.bf16.mxu0 0
    %181 = vmatpush2.bf16.msra.mxu0 0
    %182 = vmatprep.subr.bf16.mxu0 0
    %183 = vmatpush2.bf16.msra.mxu0 0
    %184 = vmatprep.subr.bf16.mxu0 0
    %185 = vmatpush2.bf16.msra.mxu0 0
    %186 = vmatprep.subr.bf16.mxu0 0
    %187 = vmatpush2.bf16.msra.mxu0 0
    %188 = vmatprep.subr.bf16.mxu0 0
    %189 = vmatpush2.bf16.msra.mxu0 0
    %190 = vmatprep.subr.bf16.mxu0 0
    %191 = vmatpush2.bf16.msra.mxu0 0
    %192 = vmatprep.mubr.bf16.mxu0 0
    %193 = vmatmul.mubr.bf16.gmra.mxu0 %v104
    %v194 = vpop.f32.mrf.mxu0
    %v195 = vadd.f32 %v83, %v194
    %v196 = vpop.f32.mrf.mxu0
    %v197 = vadd.f32 %v87, %v196
    %v198 = vpop.f32.mrf.mxu0
    %v199 = vpop.f32.mrf.mxu0
    %200 = vdwg.mxu0
    %v201 = vmax.f32 %v154, 0.0
    %v202 = vmax.f32 %v156, 0.0
    %v203 = vmax.f32 %v195, 0.0
    %v204 = vmax.f32 %v197, 0.0
    %v205 = vpack.c.bf16 %v201, %v201
    %v206 = vpack.c.bf16 %v202, %v202
    %v207 = vpack.c.bf16 %v203, %v203
    %v208 = vpack.c.bf16 %v204, %v204
    %v209 = vld [vmem:[#allocation4] sm:$0xff]
    %v210 = vld [vmem:[#allocation4 + $0x8] sm:$0xff]
    %v211 = vld [vmem:[#allocation4 + $0x10] sm:$0xff]
    %v212 = vld [vmem:[#allocation4 + $0x18] sm:$0xff]
    %v213 = vld [vmem:[#allocation4 + $0x20] sm:$0xff]
    %v214 = vld [vmem:[#allocation4 + $0x28] sm:$0xff]
    %v215 = vld [vmem:[#allocation4 + $0x30] sm:$0xff]
    %v216 = vld [vmem:[#allocation4 + $0x38] sm:$0xff]
    %v217 = vld [vmem:[#allocation4 + $0x40] sm:$0xff]
    %v218 = vld [vmem:[#allocation4 + $0x48] sm:$0xff]
    %v219 = vld [vmem:[#allocation4 + $0x50] sm:$0xff]
    %v220 = vld [vmem:[#allocation4 + $0x58] sm:$0xff]
    %v221 = vld [vmem:[#allocation4 + $0x60] sm:$0xff]
    %v222 = vld [vmem:[#allocation4 + $0x68] sm:$0xff]
    %v223 = vld [vmem:[#allocation4 + $0x70] sm:$0xff]
    %v224 = vld [vmem:[#allocation4 + $0x78] sm:$0xff]
    %v225 = vld [vmem:[#allocation4 + $0x80] sm:$0xff]
    %v226 = vld [vmem:[#allocation4 + $0x88] sm:$0xff]
    %v227 = vld [vmem:[#allocation4 + $0x90] sm:$0xff]
    %v228 = vld [vmem:[#allocation4 + $0x98] sm:$0xff]
    %v229 = vld [vmem:[#allocation4 + $0xa0] sm:$0xff]
    %v230 = vld [vmem:[#allocation4 + $0xa8] sm:$0xff]
    %v231 = vld [vmem:[#allocation4 + $0xb0] sm:$0xff]
    %v232 = vld [vmem:[#allocation4 + $0xb8] sm:$0xff]
    %v233 = vld [vmem:[#allocation4 + $0xc0] sm:$0xff]
    %v234 = vld [vmem:[#allocation4 + $0xc8] sm:$0xff]
    %v235 = vld [vmem:[#allocation4 + $0xd0] sm:$0xff]
    %v236 = vld [vmem:[#allocation4 + $0xd8] sm:$0xff]
    %v237 = vld [vmem:[#allocation4 + $0xe0] sm:$0xff]
    %v238 = vld [vmem:[#allocation4 + $0xe8] sm:$0xff]
    %v239 = vld [vmem:[#allocation4 + $0xf0] sm:$0xff]
    %v240 = vld [vmem:[#allocation4 + $0xf8] sm:$0xff]
    %v241 = vld [vmem:[#allocation4 + $0x100] sm:$0xff]
    %v242 = vld [vmem:[#allocation4 + $0x108] sm:$0xff]
    %v243 = vld [vmem:[#allocation4 + $0x110] sm:$0xff]
    %v244 = vld [vmem:[#allocation4 + $0x118] sm:$0xff]
    %v245 = vld [vmem:[#allocation4 + $0x120] sm:$0xff]
    %v246 = vld [vmem:[#allocation4 + $0x128] sm:$0xff]
    %v247 = vld [vmem:[#allocation4 + $0x130] sm:$0xff]
    %v248 = vld [vmem:[#allocation4 + $0x138] sm:$0xff]
    %v249 = vld [vmem:[#allocation4 + $0x140] sm:$0xff]
    %v250 = vld [vmem:[#allocation4 + $0x148] sm:$0xff]
    %v251 = vld [vmem:[#allocation4 + $0x150] sm:$0xff]
    %v252 = vld [vmem:[#allocation4 + $0x158] sm:$0xff]
    %v253 = vld [vmem:[#allocation4 + $0x160] sm:$0xff]
    %v254 = vld [vmem:[#allocation4 + $0x168] sm:$0xff]
    %v255 = vld [vmem:[#allocation4 + $0x170] sm:$0xff]
    %v256 = vld [vmem:[#allocation4 + $0x178] sm:$0xff]
    %v257 = vld [vmem:[#allocation4 + $0x180] sm:$0xff]
    %v258 = vld [vmem:[#allocation4 + $0x188] sm:$0xff]
    %v259 = vld [vmem:[#allocation4 + $0x190] sm:$0xff]
    %v260 = vld [vmem:[#allocation4 + $0x198] sm:$0xff]
    %v261 = vld [vmem:[#allocation4 + $0x1a0] sm:$0xff]
    %v262 = vld [vmem:[#allocation4 + $0x1a8] sm:$0xff]
    %v263 = vld [vmem:[#allocation4 + $0x1b0] sm:$0xff]
    %v264 = vld [vmem:[#allocation4 + $0x1b8] sm:$0xff]
    %v265 = vld [vmem:[#allocation4 + $0x1c0] sm:$0xff]
    %v266 = vld [vmem:[#allocation4 + $0x1c8] sm:$0xff]
    %v267 = vld [vmem:[#allocation4 + $0x1d0] sm:$0xff]
    %v268 = vld [vmem:[#allocation4 + $0x1d8] sm:$0xff]
    %v269 = vld [vmem:[#allocation4 + $0x1e0] sm:$0xff]
    %v270 = vld [vmem:[#allocation4 + $0x1e8] sm:$0xff]
    %v271 = vld [vmem:[#allocation4 + $0x1f0] sm:$0xff]
    %v272 = vld [vmem:[#allocation4 + $0x1f8] sm:$0xff]
    %v273 = vld [vmem:[#allocation4 + $0x200] sm:$0xff]
    %v274 = vld [vmem:[#allocation4 + $0x208] sm:$0xff]
    %v275 = vld [vmem:[#allocation4 + $0x210] sm:$0xff]
    %v276 = vld [vmem:[#allocation4 + $0x218] sm:$0xff]
    %v277 = vld [vmem:[#allocation4 + $0x220] sm:$0xff]
    %v278 = vld [vmem:[#allocation4 + $0x228] sm:$0xff]
    %v279 = vld [vmem:[#allocation4 + $0x230] sm:$0xff]
    %v280 = vld [vmem:[#allocation4 + $0x238] sm:$0xff]
    %v281 = vld [vmem:[#allocation4 + $0x240] sm:$0xff]
    %v282 = vld [vmem:[#allocation4 + $0x248] sm:$0xff]
    %v283 = vld [vmem:[#allocation4 + $0x250] sm:$0xff]
    %v284 = vld [vmem:[#allocation4 + $0x258] sm:$0xff]
    %v285 = vld [vmem:[#allocation4 + $0x260] sm:$0xff]
    %v286 = vld [vmem:[#allocation4 + $0x268] sm:$0xff]
    %v287 = vld [vmem:[#allocation4 + $0x270] sm:$0xff]
    %v288 = vld [vmem:[#allocation4 + $0x278] sm:$0xff]
    %v289 = vld [vmem:[#allocation4 + $0x280] sm:$0xff]
    %v290 = vld [vmem:[#allocation4 + $0x288] sm:$0xff]
    %v291 = vld [vmem:[#allocation4 + $0x290] sm:$0xff]
    %v292 = vld [vmem:[#allocation4 + $0x298] sm:$0xff]
    %v293 = vld [vmem:[#allocation4 + $0x2a0] sm:$0xff]
    %v294 = vld [vmem:[#allocation4 + $0x2a8] sm:$0xff]
    %v295 = vld [vmem:[#allocation4 + $0x2b0] sm:$0xff]
    %v296 = vld [vmem:[#allocation4 + $0x2b8] sm:$0xff]
    %v297 = vld [vmem:[#allocation4 + $0x2c0] sm:$0xff]
    %v298 = vld [vmem:[#allocation4 + $0x2c8] sm:$0xff]
    %v299 = vld [vmem:[#allocation4 + $0x2d0] sm:$0xff]
    %v300 = vld [vmem:[#allocation4 + $0x2d8] sm:$0xff]
    %v301 = vld [vmem:[#allocation4 + $0x2e0] sm:$0xff]
    %v302 = vld [vmem:[#allocation4 + $0x2e8] sm:$0xff]
    %v303 = vld [vmem:[#allocation4 + $0x2f0] sm:$0xff]
    %v304 = vld [vmem:[#allocation4 + $0x2f8] sm:$0xff]
    %v305 = vld [vmem:[#allocation4 + $0x300] sm:$0xff]
    %v306 = vld [vmem:[#allocation4 + $0x308] sm:$0xff]
    %v307 = vld [vmem:[#allocation4 + $0x310] sm:$0xff]
    %v308 = vld [vmem:[#allocation4 + $0x318] sm:$0xff]
    %v309 = vld [vmem:[#allocation4 + $0x320] sm:$0xff]
    %v310 = vld [vmem:[#allocation4 + $0x328] sm:$0xff]
    %v311 = vld [vmem:[#allocation4 + $0x330] sm:$0xff]
    %v312 = vld [vmem:[#allocation4 + $0x338] sm:$0xff]
    %v313 = vld [vmem:[#allocation4 + $0x340] sm:$0xff]
    %v314 = vld [vmem:[#allocation4 + $0x348] sm:$0xff]
    %v315 = vld [vmem:[#allocation4 + $0x350] sm:$0xff]
    %v316 = vld [vmem:[#allocation4 + $0x358] sm:$0xff]
    %v317 = vld [vmem:[#allocation4 + $0x360] sm:$0xff]
    %v318 = vld [vmem:[#allocation4 + $0x368] sm:$0xff]
    %v319 = vld [vmem:[#allocation4 + $0x370] sm:$0xff]
    %v320 = vld [vmem:[#allocation4 + $0x378] sm:$0xff]
    %v321 = vld [vmem:[#allocation4 + $0x380] sm:$0xff]
    %v322 = vld [vmem:[#allocation4 + $0x388] sm:$0xff]
    %v323 = vld [vmem:[#allocation4 + $0x390] sm:$0xff]
    %v324 = vld [vmem:[#allocation4 + $0x398] sm:$0xff]
    %v325 = vld [vmem:[#allocation4 + $0x3a0] sm:$0xff]
    %v326 = vld [vmem:[#allocation4 + $0x3a8] sm:$0xff]
    %v327 = vld [vmem:[#allocation4 + $0x3b0] sm:$0xff]
    %v328 = vld [vmem:[#allocation4 + $0x3b8] sm:$0xff]
    %v329 = vld [vmem:[#allocation4 + $0x3c0] sm:$0xff]
    %v330 = vld [vmem:[#allocation4 + $0x3c8] sm:$0xff]
    %v331 = vld [vmem:[#allocation4 + $0x3d0] sm:$0xff]
    %v332 = vld [vmem:[#allocation4 + $0x3d8] sm:$0xff]
    %v333 = vld [vmem:[#allocation4 + $0x3e0] sm:$0xff]
    %v334 = vld [vmem:[#allocation4 + $0x3e8] sm:$0xff]
    %v335 = vld [vmem:[#allocation4 + $0x3f0] sm:$0xff]
    %v336 = vld [vmem:[#allocation4 + $0x3f8] sm:$0xff]
    %v337 = vld [vmem:[%s4] sm:$0xf]
    %v339 = vlaneseq
    %v340 = vshrl.u32 %v339, 7
    %v341 = vsub.s32 0, %v340
    %v342 = vrot.slane %v337, %v341
    %v343 = vlaneseq
    %v344 = vshrl.u32 %v343, 7
    %v345 = vsub.s32 1, %v344
    %v346 = vrot.slane %v337, %v345
    %v347 = vlaneseq
    %v348 = vshrl.u32 %v347, 7
    %v349 = vsub.s32 2, %v348
    %v350 = vrot.slane %v337, %v349
    %v351 = vlaneseq
    %v352 = vshrl.u32 %v351, 7
    %v353 = vsub.s32 3, %v352
    %v354 = vrot.slane %v337, %v353
    %v487 = vunpack.c.l.b16 %v209
    %v488 = vunpack.c.h.b16 %v209
    %v489 = vunpack.c.l.b16 %v210
    %v490 = vunpack.c.h.b16 %v210
    %v491 = vunpack.c.l.b16 %v211
    %v492 = vunpack.c.h.b16 %v211
    %v493 = vunpack.c.l.b16 %v212
    %v494 = vunpack.c.h.b16 %v212
    %v495 = vunpack.c.l.b16 %v213
    %v496 = vunpack.c.h.b16 %v213
    %v497 = vunpack.c.l.b16 %v214
    %v498 = vunpack.c.h.b16 %v214
    %v499 = vunpack.c.l.b16 %v215
    %v500 = vunpack.c.h.b16 %v215
    %v501 = vunpack.c.l.b16 %v216
    %v502 = vunpack.c.h.b16 %v216
    %v503 = vunpack.c.l.b16 %v217
    %v504 = vunpack.c.h.b16 %v217
    %v505 = vunpack.c.l.b16 %v218
    %v506 = vunpack.c.h.b16 %v218
    %v507 = vunpack.c.l.b16 %v219
    %v508 = vunpack.c.h.b16 %v219
    %v509 = vunpack.c.l.b16 %v220
    %v510 = vunpack.c.h.b16 %v220
    %v511 = vunpack.c.l.b16 %v221
    %v512 = vunpack.c.h.b16 %v221
    %v513 = vunpack.c.l.b16 %v222
    %v514 = vunpack.c.h.b16 %v222
    %v515 = vunpack.c.l.b16 %v223
    %v516 = vunpack.c.h.b16 %v223
    %v517 = vunpack.c.l.b16 %v224
    %v518 = vunpack.c.h.b16 %v224
    %v519 = vunpack.c.l.b16 %v225
    %v520 = vunpack.c.h.b16 %v225
    %v521 = vunpack.c.l.b16 %v226
    %v522 = vunpack.c.h.b16 %v226
    %v523 = vunpack.c.l.b16 %v227
    %v524 = vunpack.c.h.b16 %v227
    %v525 = vunpack.c.l.b16 %v228
    %v526 = vunpack.c.h.b16 %v228
    %v527 = vunpack.c.l.b16 %v229
    %v528 = vunpack.c.h.b16 %v229
    %v529 = vunpack.c.l.b16 %v230
    %v530 = vunpack.c.h.b16 %v230
    %v531 = vunpack.c.l.b16 %v231
    %v532 = vunpack.c.h.b16 %v231
    %v533 = vunpack.c.l.b16 %v232
    %v534 = vunpack.c.h.b16 %v232
    %v535 = vunpack.c.l.b16 %v233
    %v536 = vunpack.c.h.b16 %v233
    %v537 = vunpack.c.l.b16 %v234
    %v538 = vunpack.c.h.b16 %v234
    %v539 = vunpack.c.l.b16 %v235
    %v540 = vunpack.c.h.b16 %v235
    %v541 = vunpack.c.l.b16 %v236
    %v542 = vunpack.c.h.b16 %v236
    %v543 = vunpack.c.l.b16 %v237
    %v544 = vunpack.c.h.b16 %v237
    %v545 = vunpack.c.l.b16 %v238
    %v546 = vunpack.c.h.b16 %v238
    %v547 = vunpack.c.l.b16 %v239
    %v548 = vunpack.c.h.b16 %v239
    %v549 = vunpack.c.l.b16 %v240
    %v550 = vunpack.c.h.b16 %v240
    %v551 = vunpack.c.l.b16 %v241
    %v552 = vunpack.c.h.b16 %v241
    %v553 = vunpack.c.l.b16 %v242
    %v554 = vunpack.c.h.b16 %v242
    %v555 = vunpack.c.l.b16 %v243
    %v556 = vunpack.c.h.b16 %v243
    %v557 = vunpack.c.l.b16 %v244
    %v558 = vunpack.c.h.b16 %v244
    %v559 = vunpack.c.l.b16 %v245
    %v560 = vunpack.c.h.b16 %v245
    %v561 = vunpack.c.l.b16 %v246
    %v562 = vunpack.c.h.b16 %v246
    %v563 = vunpack.c.l.b16 %v247
    %v564 = vunpack.c.h.b16 %v247
    %v565 = vunpack.c.l.b16 %v248
    %v566 = vunpack.c.h.b16 %v248
    %v567 = vunpack.c.l.b16 %v249
    %v568 = vunpack.c.h.b16 %v249
    %v569 = vunpack.c.l.b16 %v250
    %v570 = vunpack.c.h.b16 %v250
    %v571 = vunpack.c.l.b16 %v251
    %v572 = vunpack.c.h.b16 %v251
    %v573 = vunpack.c.l.b16 %v252
    %v574 = vunpack.c.h.b16 %v252
    %v575 = vunpack.c.l.b16 %v253
    %v576 = vunpack.c.h.b16 %v253
    %v577 = vunpack.c.l.b16 %v254
    %v578 = vunpack.c.h.b16 %v254
    %v579 = vunpack.c.l.b16 %v255
    %v580 = vunpack.c.h.b16 %v255
    %v581 = vunpack.c.l.b16 %v256
    %v582 = vunpack.c.h.b16 %v256
    %v583 = vunpack.c.l.b16 %v257
    %v584 = vunpack.c.h.b16 %v257
    %v585 = vunpack.c.l.b16 %v258
    %v586 = vunpack.c.h.b16 %v258
    %v587 = vunpack.c.l.b16 %v259
    %v588 = vunpack.c.h.b16 %v259
    %v589 = vunpack.c.l.b16 %v260
    %v590 = vunpack.c.h.b16 %v260
    %v591 = vunpack.c.l.b16 %v261
    %v592 = vunpack.c.h.b16 %v261
    %v593 = vunpack.c.l.b16 %v262
    %v594 = vunpack.c.h.b16 %v262
    %v595 = vunpack.c.l.b16 %v263
    %v596 = vunpack.c.h.b16 %v263
    %v597 = vunpack.c.l.b16 %v264
    %v598 = vunpack.c.h.b16 %v264
    %v599 = vunpack.c.l.b16 %v265
    %v600 = vunpack.c.h.b16 %v265
    %v601 = vunpack.c.l.b16 %v266
    %v602 = vunpack.c.h.b16 %v266
    %v603 = vunpack.c.l.b16 %v267
    %v604 = vunpack.c.h.b16 %v267
    %v605 = vunpack.c.l.b16 %v268
    %v606 = vunpack.c.h.b16 %v268
    %v607 = vunpack.c.l.b16 %v269
    %v608 = vunpack.c.h.b16 %v269
    %v609 = vunpack.c.l.b16 %v270
    %v610 = vunpack.c.h.b16 %v270
    %v611 = vunpack.c.l.b16 %v271
    %v612 = vunpack.c.h.b16 %v271
    %v613 = vunpack.c.l.b16 %v272
    %v614 = vunpack.c.h.b16 %v272
    %v615 = vunpack.c.l.b16 %v273
    %v616 = vunpack.c.h.b16 %v273
    %v617 = vunpack.c.l.b16 %v274
    %v618 = vunpack.c.h.b16 %v274
    %v619 = vunpack.c.l.b16 %v275
    %v620 = vunpack.c.h.b16 %v275
    %v621 = vunpack.c.l.b16 %v276
    %v622 = vunpack.c.h.b16 %v276
    %v623 = vunpack.c.l.b16 %v277
    %v624 = vunpack.c.h.b16 %v277
    %v625 = vunpack.c.l.b16 %v278
    %v626 = vunpack.c.h.b16 %v278
    %v627 = vunpack.c.l.b16 %v279
    %v628 = vunpack.c.h.b16 %v279
    %v629 = vunpack.c.l.b16 %v280
    %v630 = vunpack.c.h.b16 %v280
    %v631 = vunpack.c.l.b16 %v281
    %v632 = vunpack.c.h.b16 %v281
    %v633 = vunpack.c.l.b16 %v282
    %v634 = vunpack.c.h.b16 %v282
    %v635 = vunpack.c.l.b16 %v283
    %v636 = vunpack.c.h.b16 %v283
    %v637 = vunpack.c.l.b16 %v284
    %v638 = vunpack.c.h.b16 %v284
    %v639 = vunpack.c.l.b16 %v285
    %v640 = vunpack.c.h.b16 %v285
    %v641 = vunpack.c.l.b16 %v286
    %v642 = vunpack.c.h.b16 %v286
    %v643 = vunpack.c.l.b16 %v287
    %v644 = vunpack.c.h.b16 %v287
    %v645 = vunpack.c.l.b16 %v288
    %v646 = vunpack.c.h.b16 %v288
    %v647 = vunpack.c.l.b16 %v289
    %v648 = vunpack.c.h.b16 %v289
    %v649 = vunpack.c.l.b16 %v290
    %v650 = vunpack.c.h.b16 %v290
    %v651 = vunpack.c.l.b16 %v291
    %v652 = vunpack.c.h.b16 %v291
    %v653 = vunpack.c.l.b16 %v292
    %v654 = vunpack.c.h.b16 %v292
    %v655 = vunpack.c.l.b16 %v293
    %v656 = vunpack.c.h.b16 %v293
    %v657 = vunpack.c.l.b16 %v294
    %v658 = vunpack.c.h.b16 %v294
    %v659 = vunpack.c.l.b16 %v295
    %v660 = vunpack.c.h.b16 %v295
    %v661 = vunpack.c.l.b16 %v296
    %v662 = vunpack.c.h.b16 %v296
    %v663 = vunpack.c.l.b16 %v297
    %v664 = vunpack.c.h.b16 %v297
    %v665 = vunpack.c.l.b16 %v298
    %v666 = vunpack.c.h.b16 %v298
    %v667 = vunpack.c.l.b16 %v299
    %v668 = vunpack.c.h.b16 %v299
    %v669 = vunpack.c.l.b16 %v300
    %v670 = vunpack.c.h.b16 %v300
    %v671 = vunpack.c.l.b16 %v301
    %v672 = vunpack.c.h.b16 %v301
    %v673 = vunpack.c.l.b16 %v302
    %v674 = vunpack.c.h.b16 %v302
    %v675 = vunpack.c.l.b16 %v303
    %v676 = vunpack.c.h.b16 %v303
    %v677 = vunpack.c.l.b16 %v304
    %v678 = vunpack.c.h.b16 %v304
    %v679 = vunpack.c.l.b16 %v305
    %v680 = vunpack.c.h.b16 %v305
    %v681 = vunpack.c.l.b16 %v306
    %v682 = vunpack.c.h.b16 %v306
    %v683 = vunpack.c.l.b16 %v307
    %v684 = vunpack.c.h.b16 %v307
    %v685 = vunpack.c.l.b16 %v308
    %v686 = vunpack.c.h.b16 %v308
    %v687 = vunpack.c.l.b16 %v309
    %v688 = vunpack.c.h.b16 %v309
    %v689 = vunpack.c.l.b16 %v310
    %v690 = vunpack.c.h.b16 %v310
    %v691 = vunpack.c.l.b16 %v311
    %v692 = vunpack.c.h.b16 %v311
    %v693 = vunpack.c.l.b16 %v312
    %v694 = vunpack.c.h.b16 %v312
    %v695 = vunpack.c.l.b16 %v313
    %v696 = vunpack.c.h.b16 %v313
    %v697 = vunpack.c.l.b16 %v314
    %v698 = vunpack.c.h.b16 %v314
    %v699 = vunpack.c.l.b16 %v315
    %v700 = vunpack.c.h.b16 %v315
    %v701 = vunpack.c.l.b16 %v316
    %v702 = vunpack.c.h.b16 %v316
    %v703 = vunpack.c.l.b16 %v317
    %v704 = vunpack.c.h.b16 %v317
    %v705 = vunpack.c.l.b16 %v318
    %v706 = vunpack.c.h.b16 %v318
    %v707 = vunpack.c.l.b16 %v319
    %v708 = vunpack.c.h.b16 %v319
    %v709 = vunpack.c.l.b16 %v320
    %v710 = vunpack.c.h.b16 %v320
    %v711 = vunpack.c.l.b16 %v321
    %v712 = vunpack.c.h.b16 %v321
    %v713 = vunpack.c.l.b16 %v322
    %v714 = vunpack.c.h.b16 %v322
    %v715 = vunpack.c.l.b16 %v323
    %v716 = vunpack.c.h.b16 %v323
    %v717 = vunpack.c.l.b16 %v324
    %v718 = vunpack.c.h.b16 %v324
    %v719 = vunpack.c.l.b16 %v325
    %v720 = vunpack.c.h.b16 %v325
    %v721 = vunpack.c.l.b16 %v326
    %v722 = vunpack.c.h.b16 %v326
    %v723 = vunpack.c.l.b16 %v327
    %v724 = vunpack.c.h.b16 %v327
    %v725 = vunpack.c.l.b16 %v328
    %v726 = vunpack.c.h.b16 %v328
    %v727 = vunpack.c.l.b16 %v329
    %v728 = vunpack.c.h.b16 %v329
    %v729 = vunpack.c.l.b16 %v330
    %v730 = vunpack.c.h.b16 %v330
    %v731 = vunpack.c.l.b16 %v331
    %v732 = vunpack.c.h.b16 %v331
    %v733 = vunpack.c.l.b16 %v332
    %v734 = vunpack.c.h.b16 %v332
    %v735 = vunpack.c.l.b16 %v333
    %v736 = vunpack.c.h.b16 %v333
    %v737 = vunpack.c.l.b16 %v334
    %v738 = vunpack.c.h.b16 %v334
    %v739 = vunpack.c.l.b16 %v335
    %v740 = vunpack.c.h.b16 %v335
    %v741 = vunpack.c.l.b16 %v336
    %v742 = vunpack.c.h.b16 %v336
    %v743 = vpack.c.b16 %v491, %v487
    %v744 = vpack.c.b16 %v492, %v488
    %v745 = vpack.c.b16 %v493, %v489
    %v746 = vpack.c.b16 %v494, %v490
    %v747 = vpack.c.b16 %v499, %v495
    %v748 = vpack.c.b16 %v500, %v496
    %v749 = vpack.c.b16 %v501, %v497
    %v750 = vpack.c.b16 %v502, %v498
    %v751 = vpack.c.b16 %v507, %v503
    %v752 = vpack.c.b16 %v508, %v504
    %v753 = vpack.c.b16 %v509, %v505
    %v754 = vpack.c.b16 %v510, %v506
    %v755 = vpack.c.b16 %v515, %v511
    %v756 = vpack.c.b16 %v516, %v512
    %v757 = vpack.c.b16 %v517, %v513
    %v758 = vpack.c.b16 %v518, %v514
    %v759 = vpack.c.b16 %v523, %v519
    %v760 = vpack.c.b16 %v524, %v520
    %v761 = vpack.c.b16 %v525, %v521
    %v762 = vpack.c.b16 %v526, %v522
    %v763 = vpack.c.b16 %v531, %v527
    %v764 = vpack.c.b16 %v532, %v528
    %v765 = vpack.c.b16 %v533, %v529
    %v766 = vpack.c.b16 %v534, %v530
    %v767 = vpack.c.b16 %v539, %v535
    %v768 = vpack.c.b16 %v540, %v536
    %v769 = vpack.c.b16 %v541, %v537
    %v770 = vpack.c.b16 %v542, %v538
    %v771 = vpack.c.b16 %v547, %v543
    %v772 = vpack.c.b16 %v548, %v544
    %v773 = vpack.c.b16 %v549, %v545
    %v774 = vpack.c.b16 %v550, %v546
    %v775 = vpack.c.b16 %v555, %v551
    %v776 = vpack.c.b16 %v556, %v552
    %v777 = vpack.c.b16 %v557, %v553
    %v778 = vpack.c.b16 %v558, %v554
    %v779 = vpack.c.b16 %v563, %v559
    %v780 = vpack.c.b16 %v564, %v560
    %v781 = vpack.c.b16 %v565, %v561
    %v782 = vpack.c.b16 %v566, %v562
    %v783 = vpack.c.b16 %v571, %v567
    %v784 = vpack.c.b16 %v572, %v568
    %v785 = vpack.c.b16 %v573, %v569
    %v786 = vpack.c.b16 %v574, %v570
    %v787 = vpack.c.b16 %v579, %v575
    %v788 = vpack.c.b16 %v580, %v576
    %v789 = vpack.c.b16 %v581, %v577
    %v790 = vpack.c.b16 %v582, %v578
    %v791 = vpack.c.b16 %v587, %v583
    %v792 = vpack.c.b16 %v588, %v584
    %v793 = vpack.c.b16 %v589, %v585
    %v794 = vpack.c.b16 %v590, %v586
    %v795 = vpack.c.b16 %v595, %v591
    %v796 = vpack.c.b16 %v596, %v592
    %v797 = vpack.c.b16 %v597, %v593
    %v798 = vpack.c.b16 %v598, %v594
    %v799 = vpack.c.b16 %v603, %v599
    %v800 = vpack.c.b16 %v604, %v600
    %v801 = vpack.c.b16 %v605, %v601
    %v802 = vpack.c.b16 %v606, %v602
    %v803 = vpack.c.b16 %v611, %v607
    %v804 = vpack.c.b16 %v612, %v608
    %v805 = vpack.c.b16 %v613, %v609
    %v806 = vpack.c.b16 %v614, %v610
    %v807 = vpack.c.b16 %v619, %v615
    %v808 = vpack.c.b16 %v620, %v616
    %v809 = vpack.c.b16 %v621, %v617
    %v810 = vpack.c.b16 %v622, %v618
    %v811 = vpack.c.b16 %v627, %v623
    %v812 = vpack.c.b16 %v628, %v624
    %v813 = vpack.c.b16 %v629, %v625
    %v814 = vpack.c.b16 %v630, %v626
    %v815 = vpack.c.b16 %v635, %v631
    %v816 = vpack.c.b16 %v636, %v632
    %v817 = vpack.c.b16 %v637, %v633
    %v818 = vpack.c.b16 %v638, %v634
    %v819 = vpack.c.b16 %v643, %v639
    %v820 = vpack.c.b16 %v644, %v640
    %v821 = vpack.c.b16 %v645, %v641
    %v822 = vpack.c.b16 %v646, %v642
    %v823 = vpack.c.b16 %v651, %v647
    %v824 = vpack.c.b16 %v652, %v648
    %v825 = vpack.c.b16 %v653, %v649
    %v826 = vpack.c.b16 %v654, %v650
    %v827 = vpack.c.b16 %v659, %v655
    %v828 = vpack.c.b16 %v660, %v656
    %v829 = vpack.c.b16 %v661, %v657
    %v830 = vpack.c.b16 %v662, %v658
    %v831 = vpack.c.b16 %v667, %v663
    %v832 = vpack.c.b16 %v668, %v664
    %v833 = vpack.c.b16 %v669, %v665
    %v834 = vpack.c.b16 %v670, %v666
    %v835 = vpack.c.b16 %v675, %v671
    %v836 = vpack.c.b16 %v676, %v672
    %v837 = vpack.c.b16 %v677, %v673
    %v838 = vpack.c.b16 %v678, %v674
    %v839 = vpack.c.b16 %v683, %v679
    %v840 = vpack.c.b16 %v684, %v680
    %v841 = vpack.c.b16 %v685, %v681
    %v842 = vpack.c.b16 %v686, %v682
    %v843 = vpack.c.b16 %v691, %v687
    %v844 = vpack.c.b16 %v692, %v688
    %v845 = vpack.c.b16 %v693, %v689
    %v846 = vpack.c.b16 %v694, %v690
    %v847 = vpack.c.b16 %v699, %v695
    %v848 = vpack.c.b16 %v700, %v696
    %v849 = vpack.c.b16 %v701, %v697
    %v850 = vpack.c.b16 %v702, %v698
    %v851 = vpack.c.b16 %v707, %v703
    %v852 = vpack.c.b16 %v708, %v704
    %v853 = vpack.c.b16 %v709, %v705
    %v854 = vpack.c.b16 %v710, %v706
    %v855 = vpack.c.b16 %v715, %v711
    %v856 = vpack.c.b16 %v716, %v712
    %v857 = vpack.c.b16 %v717, %v713
    %v858 = vpack.c.b16 %v718, %v714
    %v859 = vpack.c.b16 %v723, %v719
    %v860 = vpack.c.b16 %v724, %v720
    %v861 = vpack.c.b16 %v725, %v721
    %v862 = vpack.c.b16 %v726, %v722
    %v863 = vpack.c.b16 %v731, %v727
    %v864 = vpack.c.b16 %v732, %v728
    %v865 = vpack.c.b16 %v733, %v729
    %v866 = vpack.c.b16 %v734, %v730
    %v867 = vpack.c.b16 %v739, %v735
    %v868 = vpack.c.b16 %v740, %v736
    %v869 = vpack.c.b16 %v741, %v737
    %v870 = vpack.c.b16 %v742, %v738
    %999 = vmatprep.subr.bf16.mxu0 %v772
    %1000 = vmatpush1.bf16.msra.mxu0 %v771
    %1001 = vmatprep.subr.bf16.mxu0 %v768
    %1002 = vmatpush1.bf16.msra.mxu0 %v767
    %1003 = vmatprep.subr.bf16.mxu0 %v764
    %1004 = vmatpush1.bf16.msra.mxu0 %v763
    %1005 = vmatprep.subr.bf16.mxu0 %v760
    %1006 = vmatpush1.bf16.msra.mxu0 %v759
    %1007 = vmatprep.subr.bf16.mxu0 %v756
    %1008 = vmatpush1.bf16.msra.mxu0 %v755
    %1009 = vmatprep.subr.bf16.mxu0 %v752
    %1010 = vmatpush1.bf16.msra.mxu0 %v751
    %1011 = vmatprep.subr.bf16.mxu0 %v748
    %1012 = vmatpush1.bf16.msra.mxu0 %v747
    %1013 = vmatprep.subr.bf16.mxu0 %v744
    %1014 = vmatpush1.bf16.msra.mxu0 %v743
    %1015 = vmatprep.subr.bf16.mxu0 %v804
    %1016 = vmatpush2.bf16.msra.mxu0 %v803
    %1017 = vmatprep.subr.bf16.mxu0 %v800
    %1018 = vmatpush2.bf16.msra.mxu0 %v799
    %1019 = vmatprep.subr.bf16.mxu0 %v796
    %1020 = vmatpush2.bf16.msra.mxu0 %v795
    %1021 = vmatprep.subr.bf16.mxu0 %v792
    %1022 = vmatpush2.bf16.msra.mxu0 %v791
    %1023 = vmatprep.subr.bf16.mxu0 %v788
    %1024 = vmatpush2.bf16.msra.mxu0 %v787
    %1025 = vmatprep.subr.bf16.mxu0 %v784
    %1026 = vmatpush2.bf16.msra.mxu0 %v783
    %1027 = vmatprep.subr.bf16.mxu0 %v780
    %1028 = vmatpush2.bf16.msra.mxu0 %v779
    %1029 = vmatprep.subr.bf16.mxu0 %v776
    %1030 = vmatpush2.bf16.msra.mxu0 %v775
    %1031 = vmatprep.mubr.bf16.mxu0 %v206
    %1032 = vmatmul.mubr.bf16.gmra.mxu0 %v205
    %v1033 = vpop.f32.mrf.mxu0
    %v1034 = vadd.f32 %v342, %v1033
    %v1035 = vpop.f32.mrf.mxu0
    %v1036 = vadd.f32 %v346, %v1035
    %v1037 = vpop.f32.mrf.mxu0
    %v1038 = vpop.f32.mrf.mxu0
    %1039 = vdwg.mxu0
    %1040 = vmatprep.subr.bf16.mxu0 %v836
    %1041 = vmatpush1.bf16.msra.mxu0 %v835
    %1042 = vmatprep.subr.bf16.mxu0 %v832
    %1043 = vmatpush1.bf16.msra.mxu0 %v831
    %1044 = vmatprep.subr.bf16.mxu0 %v828
    %1045 = vmatpush1.bf16.msra.mxu0 %v827
    %1046 = vmatprep.subr.bf16.mxu0 %v824
    %1047 = vmatpush1.bf16.msra.mxu0 %v823
    %1048 = vmatprep.subr.bf16.mxu0 %v820
    %1049 = vmatpush1.bf16.msra.mxu0 %v819
    %1050 = vmatprep.subr.bf16.mxu0 %v816
    %1051 = vmatpush1.bf16.msra.mxu0 %v815
    %1052 = vmatprep.subr.bf16.mxu0 %v812
    %1053 = vmatpush1.bf16.msra.mxu0 %v811
    %1054 = vmatprep.subr.bf16.mxu0 %v808
    %1055 = vmatpush1.bf16.msra.mxu0 %v807
    %1056 = vmatprep.subr.bf16.mxu0 %v868
    %1057 = vmatpush2.bf16.msra.mxu0 %v867
    %1058 = vmatprep.subr.bf16.mxu0 %v864
    %1059 = vmatpush2.bf16.msra.mxu0 %v863
    %1060 = vmatprep.subr.bf16.mxu0 %v860
    %1061 = vmatpush2.bf16.msra.mxu0 %v859
    %1062 = vmatprep.subr.bf16.mxu0 %v856
    %1063 = vmatpush2.bf16.msra.mxu0 %v855
    %1064 = vmatprep.subr.bf16.mxu0 %v852
    %1065 = vmatpush2.bf16.msra.mxu0 %v851
    %1066 = vmatprep.subr.bf16.mxu0 %v848
    %1067 = vmatpush2.bf16.msra.mxu0 %v847
    %1068 = vmatprep.subr.bf16.mxu0 %v844
    %1069 = vmatpush2.bf16.msra.mxu0 %v843
    %1070 = vmatprep.subr.bf16.mxu0 %v840
    %1071 = vmatpush2.bf16.msra.mxu0 %v839
    %1072 = vmatprep.mubr.bf16.mxu0 %v208
    %1073 = vmatmul.mubr.bf16.gmra.mxu0 %v207
    %v1074 = vpop.f32.mrf.mxu0
    %v1075 = vadd.f32 %v1034, %v1074
    %v1076 = vpop.f32.mrf.mxu0
    %v1077 = vadd.f32 %v1036, %v1076
    %v1078 = vpop.f32.mrf.mxu0
    %v1079 = vpop.f32.mrf.mxu0
    %1080 = vdwg.mxu0
    %1081 = vmatprep.subr.bf16.mxu0 %v774
    %1082 = vmatpush1.bf16.msra.mxu0 %v773
    %1083 = vmatprep.subr.bf16.mxu0 %v770
    %1084 = vmatpush1.bf16.msra.mxu0 %v769
    %1085 = vmatprep.subr.bf16.mxu0 %v766
    %1086 = vmatpush1.bf16.msra.mxu0 %v765
    %1087 = vmatprep.subr.bf16.mxu0 %v762
    %1088 = vmatpush1.bf16.msra.mxu0 %v761
    %1089 = vmatprep.subr.bf16.mxu0 %v758
    %1090 = vmatpush1.bf16.msra.mxu0 %v757
    %1091 = vmatprep.subr.bf16.mxu0 %v754
    %1092 = vmatpush1.bf16.msra.mxu0 %v753
    %1093 = vmatprep.subr.bf16.mxu0 %v750
    %1094 = vmatpush1.bf16.msra.mxu0 %v749
    %1095 = vmatprep.subr.bf16.mxu0 %v746
    %1096 = vmatpush1.bf16.msra.mxu0 %v745
    %1097 = vmatprep.subr.bf16.mxu0 %v806
    %1098 = vmatpush2.bf16.msra.mxu0 %v805
    %1099 = vmatprep.subr.bf16.mxu0 %v802
    %1100 = vmatpush2.bf16.msra.mxu0 %v801
    %1101 = vmatprep.subr.bf16.mxu0 %v798
    %1102 = vmatpush2.bf16.msra.mxu0 %v797
    %1103 = vmatprep.subr.bf16.mxu0 %v794
    %1104 = vmatpush2.bf16.msra.mxu0 %v793
    %1105 = vmatprep.subr.bf16.mxu0 %v790
    %1106 = vmatpush2.bf16.msra.mxu0 %v789
    %1107 = vmatprep.subr.bf16.mxu0 %v786
    %1108 = vmatpush2.bf16.msra.mxu0 %v785
    %1109 = vmatprep.subr.bf16.mxu0 %v782
    %1110 = vmatpush2.bf16.msra.mxu0 %v781
    %1111 = vmatprep.subr.bf16.mxu0 %v778
    %1112 = vmatpush2.bf16.msra.mxu0 %v777
    %1113 = vmatprep.mubr.bf16.mxu0 %v206
    %1114 = vmatmul.mubr.bf16.gmra.mxu0 %v205
    %v1115 = vpop.f32.mrf.mxu0
    %v1116 = vadd.f32 %v350, %v1115
    %v1117 = vpop.f32.mrf.mxu0
    %v1118 = vadd.f32 %v354, %v1117
    %v1119 = vpop.f32.mrf.mxu0
    %v1120 = vpop.f32.mrf.mxu0
    %1121 = vdwg.mxu0
    %1122 = vmatprep.subr.bf16.mxu0 %v838
    %1123 = vmatpush1.bf16.msra.mxu0 %v837
    %1124 = vmatprep.subr.bf16.mxu0 %v834
    %1125 = vmatpush1.bf16.msra.mxu0 %v833
    %1126 = vmatprep.subr.bf16.mxu0 %v830
    %1127 = vmatpush1.bf16.msra.mxu0 %v829
    %1128 = vmatprep.subr.bf16.mxu0 %v826
    %1129 = vmatpush1.bf16.msra.mxu0 %v825
    %1130 = vmatprep.subr.bf16.mxu0 %v822
    %1131 = vmatpush1.bf16.msra.mxu0 %v821
    %1132 = vmatprep.subr.bf16.mxu0 %v818
    %1133 = vmatpush1.bf16.msra.mxu0 %v817
    %1134 = vmatprep.subr.bf16.mxu0 %v814
    %1135 = vmatpush1.bf16.msra.mxu0 %v813
    %1136 = vmatprep.subr.bf16.mxu0 %v810
    %1137 = vmatpush1.bf16.msra.mxu0 %v809
    %1138 = vmatprep.subr.bf16.mxu0 %v870
    %1139 = vmatpush2.bf16.msra.mxu0 %v869
    %1140 = vmatprep.subr.bf16.mxu0 %v866
    %1141 = vmatpush2.bf16.msra.mxu0 %v865
    %1142 = vmatprep.subr.bf16.mxu0 %v862
    %1143 = vmatpush2.bf16.msra.mxu0 %v861
    %1144 = vmatprep.subr.bf16.mxu0 %v858
    %1145 = vmatpush2.bf16.msra.mxu0 %v857
    %1146 = vmatprep.subr.bf16.mxu0 %v854
    %1147 = vmatpush2.bf16.msra.mxu0 %v853
    %1148 = vmatprep.subr.bf16.mxu0 %v850
    %1149 = vmatpush2.bf16.msra.mxu0 %v849
    %1150 = vmatprep.subr.bf16.mxu0 %v846
    %1151 = vmatpush2.bf16.msra.mxu0 %v845
    %1152 = vmatprep.subr.bf16.mxu0 %v842
    %1153 = vmatpush2.bf16.msra.mxu0 %v841
    %1154 = vmatprep.mubr.bf16.mxu0 %v208
    %1155 = vmatmul.mubr.bf16.gmra.mxu0 %v207
    %v1156 = vpop.f32.mrf.mxu0
    %v1157 = vadd.f32 %v1116, %v1156
    %v1158 = vpop.f32.mrf.mxu0
    %v1159 = vadd.f32 %v1118, %v1158
    %v1160 = vpop.f32.mrf.mxu0
    %v1161 = vpop.f32.mrf.mxu0
    %1162 = vdwg.mxu0
    %v1163 = vmax.f32 %v1075, 0.0
    %v1164 = vmax.f32 %v1077, 0.0
    %v1165 = vmax.f32 %v1157, 0.0
    %v1166 = vmax.f32 %v1159, 0.0
    %v1167 = vpack.c.bf16 %v1163, %v1163
    %v1168 = vpack.c.bf16 %v1164, %v1164
    %v1169 = vpack.c.bf16 %v1165, %v1165
    %v1170 = vpack.c.bf16 %v1166, %v1166
    %v1171 = vld [vmem:[#allocation6] sm:$0xf]
    %v1172 = vld [vmem:[#allocation6 + $0x4] sm:$0xf]
    %v1173 = vld [vmem:[#allocation6 + $0x8] sm:$0xf]
    %v1174 = vld [vmem:[#allocation6 + $0xc] sm:$0xf]
    %v1175 = vld [vmem:[#allocation6 + $0x10] sm:$0xf]
    %v1176 = vld [vmem:[#allocation6 + $0x14] sm:$0xf]
    %v1177 = vld [vmem:[#allocation6 + $0x18] sm:$0xf]
    %v1178 = vld [vmem:[#allocation6 + $0x1c] sm:$0xf]
    %v1179 = vld [vmem:[#allocation6 + $0x20] sm:$0xf]
    %v1180 = vld [vmem:[#allocation6 + $0x24] sm:$0xf]
    %v1181 = vld [vmem:[#allocation6 + $0x28] sm:$0xf]
    %v1182 = vld [vmem:[#allocation6 + $0x2c] sm:$0xf]
    %v1183 = vld [vmem:[#allocation6 + $0x30] sm:$0xf]
    %v1184 = vld [vmem:[#allocation6 + $0x34] sm:$0xf]
    %v1185 = vld [vmem:[#allocation6 + $0x38] sm:$0xf]
    %v1186 = vld [vmem:[#allocation6 + $0x3c] sm:$0xf]
    %v1187 = vld [vmem:[#allocation6 + $0x40] sm:$0xf]
    %v1188 = vld [vmem:[#allocation6 + $0x44] sm:$0xf]
    %v1189 = vld [vmem:[#allocation6 + $0x48] sm:$0xf]
    %v1190 = vld [vmem:[#allocation6 + $0x4c] sm:$0xf]
    %v1191 = vld [vmem:[#allocation6 + $0x50] sm:$0xf]
    %v1192 = vld [vmem:[#allocation6 + $0x54] sm:$0xf]
    %v1193 = vld [vmem:[#allocation6 + $0x58] sm:$0xf]
    %v1194 = vld [vmem:[#allocation6 + $0x5c] sm:$0xf]
    %v1195 = vld [vmem:[#allocation6 + $0x60] sm:$0xf]
    %v1196 = vld [vmem:[#allocation6 + $0x64] sm:$0xf]
    %v1197 = vld [vmem:[#allocation6 + $0x68] sm:$0xf]
    %v1198 = vld [vmem:[#allocation6 + $0x6c] sm:$0xf]
    %v1199 = vld [vmem:[#allocation6 + $0x70] sm:$0xf]
    %v1200 = vld [vmem:[#allocation6 + $0x74] sm:$0xf]
    %v1201 = vld [vmem:[#allocation6 + $0x78] sm:$0xf]
    %v1202 = vld [vmem:[#allocation6 + $0x7c] sm:$0xf]
    %v1203 = vld [vmem:[#allocation6 + $0x80] sm:$0xf]
    %v1204 = vld [vmem:[#allocation6 + $0x84] sm:$0xf]
    %v1205 = vld [vmem:[#allocation6 + $0x88] sm:$0xf]
    %v1206 = vld [vmem:[#allocation6 + $0x8c] sm:$0xf]
    %v1207 = vld [vmem:[#allocation6 + $0x90] sm:$0xf]
    %v1208 = vld [vmem:[#allocation6 + $0x94] sm:$0xf]
    %v1209 = vld [vmem:[#allocation6 + $0x98] sm:$0xf]
    %v1210 = vld [vmem:[#allocation6 + $0x9c] sm:$0xf]
    %v1211 = vld [vmem:[#allocation6 + $0xa0] sm:$0xf]
    %v1212 = vld [vmem:[#allocation6 + $0xa4] sm:$0xf]
    %v1213 = vld [vmem:[#allocation6 + $0xa8] sm:$0xf]
    %v1214 = vld [vmem:[#allocation6 + $0xac] sm:$0xf]
    %v1215 = vld [vmem:[#allocation6 + $0xb0] sm:$0xf]
    %v1216 = vld [vmem:[#allocation6 + $0xb4] sm:$0xf]
    %v1217 = vld [vmem:[#allocation6 + $0xb8] sm:$0xf]
    %v1218 = vld [vmem:[#allocation6 + $0xbc] sm:$0xf]
    %v1219 = vld [vmem:[#allocation6 + $0xc0] sm:$0xf]
    %v1220 = vld [vmem:[#allocation6 + $0xc4] sm:$0xf]
    %v1221 = vld [vmem:[#allocation6 + $0xc8] sm:$0xf]
    %v1222 = vld [vmem:[#allocation6 + $0xcc] sm:$0xf]
    %v1223 = vld [vmem:[#allocation6 + $0xd0] sm:$0xf]
    %v1224 = vld [vmem:[#allocation6 + $0xd4] sm:$0xf]
    %v1225 = vld [vmem:[#allocation6 + $0xd8] sm:$0xf]
    %v1226 = vld [vmem:[#allocation6 + $0xdc] sm:$0xf]
    %v1227 = vld [vmem:[#allocation6 + $0xe0] sm:$0xf]
    %v1228 = vld [vmem:[#allocation6 + $0xe4] sm:$0xf]
    %v1229 = vld [vmem:[#allocation6 + $0xe8] sm:$0xf]
    %v1230 = vld [vmem:[#allocation6 + $0xec] sm:$0xf]
    %v1231 = vld [vmem:[#allocation6 + $0xf0] sm:$0xf]
    %v1232 = vld [vmem:[#allocation6 + $0xf4] sm:$0xf]
    %v1233 = vld [vmem:[#allocation6 + $0xf8] sm:$0xf]
    %v1234 = vld [vmem:[#allocation6 + $0xfc] sm:$0xf]
    %v1235 = vld [vmem:[%s6] sm:$0x1]
    %v1237 = vlaneseq
    %v1238 = vshrl.u32 %v1237, 7
    %v1239 = vsub.s32 0, %v1238
    %v1240 = vrot.slane %v1235, %v1239
    %v1306 = vunpack.c.l.b16 %v1171
    %v1307 = vunpack.c.l.b16 %v1172
    %v1308 = vunpack.c.l.b16 %v1173
    %v1309 = vunpack.c.l.b16 %v1174
    %v1310 = vunpack.c.l.b16 %v1175
    %v1311 = vunpack.c.l.b16 %v1176
    %v1312 = vunpack.c.l.b16 %v1177
    %v1313 = vunpack.c.l.b16 %v1178
    %v1314 = vunpack.c.l.b16 %v1179
    %v1315 = vunpack.c.l.b16 %v1180
    %v1316 = vunpack.c.l.b16 %v1181
    %v1317 = vunpack.c.l.b16 %v1182
    %v1318 = vunpack.c.l.b16 %v1183
    %v1319 = vunpack.c.l.b16 %v1184
    %v1320 = vunpack.c.l.b16 %v1185
    %v1321 = vunpack.c.l.b16 %v1186
    %v1322 = vunpack.c.l.b16 %v1187
    %v1323 = vunpack.c.l.b16 %v1188
    %v1324 = vunpack.c.l.b16 %v1189
    %v1325 = vunpack.c.l.b16 %v1190
    %v1326 = vunpack.c.l.b16 %v1191
    %v1327 = vunpack.c.l.b16 %v1192
    %v1328 = vunpack.c.l.b16 %v1193
    %v1329 = vunpack.c.l.b16 %v1194
    %v1330 = vunpack.c.l.b16 %v1195
    %v1331 = vunpack.c.l.b16 %v1196
    %v1332 = vunpack.c.l.b16 %v1197
    %v1333 = vunpack.c.l.b16 %v1198
    %v1334 = vunpack.c.l.b16 %v1199
    %v1335 = vunpack.c.l.b16 %v1200
    %v1336 = vunpack.c.l.b16 %v1201
    %v1337 = vunpack.c.l.b16 %v1202
    %v1338 = vunpack.c.l.b16 %v1203
    %v1339 = vunpack.c.l.b16 %v1204
    %v1340 = vunpack.c.l.b16 %v1205
    %v1341 = vunpack.c.l.b16 %v1206
    %v1342 = vunpack.c.l.b16 %v1207
    %v1343 = vunpack.c.l.b16 %v1208
    %v1344 = vunpack.c.l.b16 %v1209
    %v1345 = vunpack.c.l.b16 %v1210
    %v1346 = vunpack.c.l.b16 %v1211
    %v1347 = vunpack.c.l.b16 %v1212
    %v1348 = vunpack.c.l.b16 %v1213
    %v1349 = vunpack.c.l.b16 %v1214
    %v1350 = vunpack.c.l.b16 %v1215
    %v1351 = vunpack.c.l.b16 %v1216
    %v1352 = vunpack.c.l.b16 %v1217
    %v1353 = vunpack.c.l.b16 %v1218
    %v1354 = vunpack.c.l.b16 %v1219
    %v1355 = vunpack.c.l.b16 %v1220
    %v1356 = vunpack.c.l.b16 %v1221
    %v1357 = vunpack.c.l.b16 %v1222
    %v1358 = vunpack.c.l.b16 %v1223
    %v1359 = vunpack.c.l.b16 %v1224
    %v1360 = vunpack.c.l.b16 %v1225
    %v1361 = vunpack.c.l.b16 %v1226
    %v1362 = vunpack.c.l.b16 %v1227
    %v1363 = vunpack.c.l.b16 %v1228
    %v1364 = vunpack.c.l.b16 %v1229
    %v1365 = vunpack.c.l.b16 %v1230
    %v1366 = vunpack.c.l.b16 %v1231
    %v1367 = vunpack.c.l.b16 %v1232
    %v1368 = vunpack.c.l.b16 %v1233
    %v1369 = vunpack.c.l.b16 %v1234
    %v1370 = vpack.c.b16 %v1307, %v1306
    %v1371 = vpack.c.b16 %v1309, %v1308
    %v1372 = vpack.c.b16 %v1311, %v1310
    %v1373 = vpack.c.b16 %v1313, %v1312
    %v1374 = vpack.c.b16 %v1315, %v1314
    %v1375 = vpack.c.b16 %v1317, %v1316
    %v1376 = vpack.c.b16 %v1319, %v1318
    %v1377 = vpack.c.b16 %v1321, %v1320
    %v1378 = vpack.c.b16 %v1323, %v1322
    %v1379 = vpack.c.b16 %v1325, %v1324
    %v1380 = vpack.c.b16 %v1327, %v1326
    %v1381 = vpack.c.b16 %v1329, %v1328
    %v1382 = vpack.c.b16 %v1331, %v1330
    %v1383 = vpack.c.b16 %v1333, %v1332
    %v1384 = vpack.c.b16 %v1335, %v1334
    %v1385 = vpack.c.b16 %v1337, %v1336
    %v1386 = vpack.c.b16 %v1339, %v1338
    %v1387 = vpack.c.b16 %v1341, %v1340
    %v1388 = vpack.c.b16 %v1343, %v1342
    %v1389 = vpack.c.b16 %v1345, %v1344
    %v1390 = vpack.c.b16 %v1347, %v1346
    %v1391 = vpack.c.b16 %v1349, %v1348
    %v1392 = vpack.c.b16 %v1351, %v1350
    %v1393 = vpack.c.b16 %v1353, %v1352
    %v1394 = vpack.c.b16 %v1355, %v1354
    %v1395 = vpack.c.b16 %v1357, %v1356
    %v1396 = vpack.c.b16 %v1359, %v1358
    %v1397 = vpack.c.b16 %v1361, %v1360
    %v1398 = vpack.c.b16 %v1363, %v1362
    %v1399 = vpack.c.b16 %v1365, %v1364
    %v1400 = vpack.c.b16 %v1367, %v1366
    %v1401 = vpack.c.b16 %v1369, %v1368
    %1434 = vmatprep.subr.bf16.mxu0 0
    %1435 = vmatpush1.bf16.msra.mxu0 %v1377
    %1436 = vmatprep.subr.bf16.mxu0 0
    %1437 = vmatpush1.bf16.msra.mxu0 %v1376
    %1438 = vmatprep.subr.bf16.mxu0 0
    %1439 = vmatpush1.bf16.msra.mxu0 %v1375
    %1440 = vmatprep.subr.bf16.mxu0 0
    %1441 = vmatpush1.bf16.msra.mxu0 %v1374
    %1442 = vmatprep.subr.bf16.mxu0 0
    %1443 = vmatpush1.bf16.msra.mxu0 %v1373
    %1444 = vmatprep.subr.bf16.mxu0 0
    %1445 = vmatpush1.bf16.msra.mxu0 %v1372
    %1446 = vmatprep.subr.bf16.mxu0 0
    %1447 = vmatpush1.bf16.msra.mxu0 %v1371
    %1448 = vmatprep.subr.bf16.mxu0 0
    %1449 = vmatpush1.bf16.msra.mxu0 %v1370
    %1450 = vmatprep.subr.bf16.mxu0 0
    %1451 = vmatpush2.bf16.msra.mxu0 %v1385
    %1452 = vmatprep.subr.bf16.mxu0 0
    %1453 = vmatpush2.bf16.msra.mxu0 %v1384
    %1454 = vmatprep.subr.bf16.mxu0 0
    %1455 = vmatpush2.bf16.msra.mxu0 %v1383
    %1456 = vmatprep.subr.bf16.mxu0 0
    %1457 = vmatpush2.bf16.msra.mxu0 %v1382
    %1458 = vmatprep.subr.bf16.mxu0 0
    %1459 = vmatpush2.bf16.msra.mxu0 %v1381
    %1460 = vmatprep.subr.bf16.mxu0 0
    %1461 = vmatpush2.bf16.msra.mxu0 %v1380
    %1462 = vmatprep.subr.bf16.mxu0 0
    %1463 = vmatpush2.bf16.msra.mxu0 %v1379
    %1464 = vmatprep.subr.bf16.mxu0 0
    %1465 = vmatpush2.bf16.msra.mxu0 %v1378
    %1466 = vmatprep.mubr.bf16.mxu0 %v1168
    %1467 = vmatmul.mubr.bf16.gmra.mxu0 %v1167
    %v1468 = vpop.f32.mrf.mxu0
    %v1469 = vadd.f32 %v1240, %v1468
    %v1470 = vpop.f32.mrf.mxu0
    %v1471 = vpop.f32.mrf.mxu0
    %v1472 = vpop.f32.mrf.mxu0
    %1473 = vdwg.mxu0
    %1474 = vmatprep.subr.bf16.mxu0 0
    %1475 = vmatpush1.bf16.msra.mxu0 %v1393
    %1476 = vmatprep.subr.bf16.mxu0 0
    %1477 = vmatpush1.bf16.msra.mxu0 %v1392
    %1478 = vmatprep.subr.bf16.mxu0 0
    %1479 = vmatpush1.bf16.msra.mxu0 %v1391
    %1480 = vmatprep.subr.bf16.mxu0 0
    %1481 = vmatpush1.bf16.msra.mxu0 %v1390
    %1482 = vmatprep.subr.bf16.mxu0 0
    %1483 = vmatpush1.bf16.msra.mxu0 %v1389
    %1484 = vmatprep.subr.bf16.mxu0 0
    %1485 = vmatpush1.bf16.msra.mxu0 %v1388
    %1486 = vmatprep.subr.bf16.mxu0 0
    %1487 = vmatpush1.bf16.msra.mxu0 %v1387
    %1488 = vmatprep.subr.bf16.mxu0 0
    %1489 = vmatpush1.bf16.msra.mxu0 %v1386
    %1490 = vmatprep.subr.bf16.mxu0 0
    %1491 = vmatpush2.bf16.msra.mxu0 %v1401
    %1492 = vmatprep.subr.bf16.mxu0 0
    %1493 = vmatpush2.bf16.msra.mxu0 %v1400
    %1494 = vmatprep.subr.bf16.mxu0 0
    %1495 = vmatpush2.bf16.msra.mxu0 %v1399
    %1496 = vmatprep.subr.bf16.mxu0 0
    %1497 = vmatpush2.bf16.msra.mxu0 %v1398
    %1498 = vmatprep.subr.bf16.mxu0 0
    %1499 = vmatpush2.bf16.msra.mxu0 %v1397
    %1500 = vmatprep.subr.bf16.mxu0 0
    %1501 = vmatpush2.bf16.msra.mxu0 %v1396
    %1502 = vmatprep.subr.bf16.mxu0 0
    %1503 = vmatpush2.bf16.msra.mxu0 %v1395
    %1504 = vmatprep.subr.bf16.mxu0 0
    %1505 = vmatpush2.bf16.msra.mxu0 %v1394
    %1506 = vmatprep.mubr.bf16.mxu0 %v1170
    %1507 = vmatmul.mubr.bf16.gmra.mxu0 %v1169
    %v1508 = vpop.f32.mrf.mxu0
    %v1509 = vadd.f32 %v1469, %v1508
    %v1510 = vpop.f32.mrf.mxu0
    %v1511 = vpop.f32.mrf.mxu0
    %v1512 = vpop.f32.mrf.mxu0
    %1513 = vdwg.mxu0
    %vm1514 = vcmask 203776
    %1515 = vst.msk [vmem:[%s7] sm:$0xff] %vm1514, %v1509
    // Predicated region
    $region42: #{_mlp_forward_impl.1} parent=1 // pred_check
      _
    $region43: #{_mlp_forward_impl.1} parent=1 // pred_check_branch
      %1517 = sbr.rel (0) target = $region45
    $region44: #{_mlp_forward_impl.1} parent=1 // pred_region
      _
    $region45: #{_mlp_forward_impl.1} parent=1 // pred_fallthru
      _
    // Predicated region
    $region46: #{_mlp_forward_impl.1} parent=1 // pred_check
      _
    $region47: #{_mlp_forward_impl.1} parent=1 // pred_check_branch
      %1519 = sbr.rel (0) target = $region49
    $region48: #{_mlp_forward_impl.1} parent=1 // pred_region
      _
    $region49: #{_mlp_forward_impl.1} parent=1 // pred_fallthru
      _
    %1520 = vsyncpa [#allocation3], 1
    %1521 = vsyncpa [#allocation5], 1

</llo_original>
